<compile_context>
chip_gen: v5e
topology: v5e:2x2
jax: 0.10.0
libtpu: 0.0.40
codegen_flags: <defaults>
</compile_context>

<pallas_src>
import math

import jax
import jax.numpy as jnp
from jax.experimental import pallas as pl
from jax.experimental.pallas import tpu as pltpu

LANE = 128      # TPU lane width (last-dim tiling unit)
SUBLANE = 8     # TPU sublane width (second-to-last dim tiling unit)
HIDDEN = 64     # nn.Linear hidden width of the module
SLAB = 128      # width of both the packed input and packed output slabs


def _round_up(x, m):
    return (x + m - 1) // m * m


def _choose_batch_tile(B, max_batch_tile):
    b8 = _round_up(B, SUBLANE)
    tb = min(_round_up(max_batch_tile, SUBLANE), b8)
    # v7x has 2 TensorCores: if the whole batch fits in one grid step but is
    # big enough to split, halve the tile so the parallel grid has >= 2 steps.
    if b8 <= tb and b8 >= 2 * SUBLANE:
        tb = _round_up(b8 // 2, SUBLANE)
    return max(tb, SUBLANE)


# ----------------------------------------------------------------------------
# Kernel factory: closes over lane offsets so all slices / roll shifts / masks
# are static.
#
# Lane layout (all inside one 128-lane slab):
#   input  slab: x at [0, C), eps at [C, C+L), zeros elsewhere
#   output slab: recon at [0, C), z at [C, C+L), mu at [C+L, C+2L),
#                logvar at [C+2L, C+3L), zeros elsewhere
# ----------------------------------------------------------------------------
def _make_vae_kernel(C, L, Hp, z_off, mu_off, lv_off):
    shift_mu = (z_off - mu_off) % SLAB   # brings mu lanes onto the z/eps lanes
    shift_lv = (z_off - lv_off) % SLAB   # brings logvar lanes onto the z/eps lanes
    b1_off = 0
    b2_off = Hp
    b3_off = Hp + SLAB
    b4_off = Hp + SLAB + Hp

    def vae_kernel(
        xe_ref,     # (TB, SLAB)  packed [x | eps | 0]
        w1_ref,     # (SLAB, Hp)  w1 rows at [0,C); eps rows are zero
        w2_ref,     # (Hp, SLAB)  mu cols at [mu_off,+L), logvar cols at [lv_off,+L)
        w3_ref,     # (SLAB, Hp)  w3 rows at [z_off,+L); garbage lanes hit zero rows
        w4_ref,     # (Hp, SLAB)  recon cols at [0,C)
        bias_ref,   # (1, 2*Hp + 2*SLAB) packed [b1 | b2(enc lanes) | b3 | b4(out lanes)]
        out_ref,    # (TB, SLAB)  packed [recon | z | mu | logvar]
    ):
        f32 = jnp.float32
        xe = xe_ref[...].astype(f32)

        b1 = bias_ref[:, b1_off:b1_off + Hp]
        b2 = bias_ref[:, b2_off:b2_off + SLAB]
        b3 = bias_ref[:, b3_off:b3_off + Hp]
        b4 = bias_ref[:, b4_off:b4_off + SLAB]

        # ---- encoder (eps lanes multiply zero weight rows -> no effect) ----
        h1 = jnp.maximum(
            jnp.dot(xe, w1_ref[...], preferred_element_type=f32) + b1, 0.0)
        enc = jnp.dot(h1, w2_ref[...], preferred_element_type=f32) + b2
        # enc: mu at [mu_off,+L), logvar at [lv_off,+L), exactly zero elsewhere.

        # ---- reparameterize at the z/eps lanes (rolls go to the XLU slot) ----
        mu_at_z = pltpu.roll(enc, shift_mu, axis=1)
        lv_at_z = pltpu.roll(enc, shift_lv, axis=1)
        z_raw = mu_at_z + xe * jnp.exp(0.5 * lv_at_z)
        # z_raw is exactly z at lanes [z_off, z_off+L); finite garbage elsewhere.

        # ---- decoder (garbage lanes of z_raw hit zero rows of w3) ----
        h2 = jnp.maximum(
            jnp.dot(z_raw, w3_ref[...], preferred_element_type=f32) + b3, 0.0)
        recon = jnp.dot(h2, w4_ref[...], preferred_element_type=f32) + b4
        # recon at [0,C), exactly zero elsewhere.

        # mask z to its lanes so the three pieces are lane-disjoint
        lane = jax.lax.broadcasted_iota(jnp.int32, z_raw.shape, 1)
        z_part = jnp.where((lane >= z_off) & (lane < z_off + L), z_raw, 0.0)

        # ---- single 128-lane unmasked store (no concatenate temp) ----
        out_ref[...] = (recon + enc + z_part).astype(out_ref.dtype)

    return vae_kernel


# ----------------------------------------------------------------------------
# One-time parameter packing (hoisted out of the forward call).
# ----------------------------------------------------------------------------
def pack_params(params, input_channels, latent_dim):
    """Pad/pack raw PyTorch-layout params into the kernel's lane layout.

    Call ONCE and reuse the result; per-forward padding was pure overhead.
    """
    C, L, H = input_channels, latent_dim, HIDDEN
    Hp = _round_up(H, LANE)
    # TODO(synk): generalize the lane packing to C + 3*latent_dim > 128 (multi-vreg slab).
    assert C + 3 * L <= SLAB, "packed single-vreg layout requires C + 3L <= 128"

    (w1, b1, w2, b2, w3, b3, w4, b4) = params
    f32 = jnp.float32
    z_off, mu_off, lv_off = C, C + L, C + 2 * L

    w1p = jnp.zeros((SLAB, Hp), f32).at[:C, :H].set(w1)
    w2p = (jnp.zeros((Hp, SLAB), f32)
           .at[:H, mu_off:mu_off + L].set(w2[:, :L])
           .at[:H, lv_off:lv_off + L].set(w2[:, L:]))
    w3p = jnp.zeros((SLAB, Hp), f32).at[z_off:z_off + L, :H].set(w3)
    w4p = jnp.zeros((Hp, SLAB), f32).at[:H, :C].set(w4)

    bias_w = 2 * Hp + 2 * SLAB
    biasp = jnp.zeros((1, bias_w), f32)
    biasp = biasp.at[0, 0:H].set(b1)                                       # b1
    biasp = biasp.at[0, Hp + mu_off:Hp + mu_off + L].set(b2[:L])           # b2 (mu)
    biasp = biasp.at[0, Hp + lv_off:Hp + lv_off + L].set(b2[L:])           # b2 (logvar)
    biasp = biasp.at[0, Hp + SLAB:Hp + SLAB + H].set(b3)                   # b3
    biasp = biasp.at[0, Hp + SLAB + Hp:Hp + SLAB + Hp + C].set(b4)         # b4 (recon)
    return (w1p, w2p, w3p, w4p, biasp)


# ----------------------------------------------------------------------------
# Forward wrapper: pack x|eps into one 128-lane slab, run the batch-parallel
# grid, unpack the 128-lane output slab.
# ----------------------------------------------------------------------------
def vae_forward(x, eps, packed_params, *, max_batch_tile=1024,
                stream_dtype=jnp.float32):
    # stream_dtype=jnp.bfloat16 halves streaming HBM bytes on v6e/v7x
    # (loosen the correctness tolerance if you enable it).
    B, C = x.shape
    L = eps.shape[-1]
    H = HIDDEN
    Hp = _round_up(H, LANE)
    assert C + 3 * L <= SLAB, "packed single-vreg layout requires C + 3L <= 128"
    z_off, mu_off, lv_off = C, C + L, C + 2 * L

    TB = _choose_batch_tile(B, max_batch_tile)
    Bp = _round_up(B, TB)

    w1p, w2p, w3p, w4p, biasp = packed_params
    bias_w = biasp.shape[-1]

    # one 128-lane streaming input slab per row: [ x | eps | 0 ]
    xe = jnp.zeros((Bp, SLAB), stream_dtype)
    xe = xe.at[:B, :C].set(x.astype(stream_dtype))
    xe = xe.at[:B, z_off:z_off + L].set(eps.astype(stream_dtype))

    kernel = _make_vae_kernel(C, L, Hp, z_off, mu_off, lv_off)

    def _resident(shape):
        # constant index_map -> weights/biases DMA'd once, VMEM-resident after
        return pl.BlockSpec(shape, lambda i: (0, 0))

    out = pl.pallas_call(
        kernel,
        out_shape=jax.ShapeDtypeStruct((Bp, SLAB), stream_dtype),
        grid=(Bp // TB,),
        in_specs=[
            pl.BlockSpec((TB, SLAB), lambda i: (i, 0)),   # packed x|eps (streamed)
            _resident((SLAB, Hp)),                        # w1
            _resident((Hp, SLAB)),                        # w2 (fused mu/logvar head)
            _resident((SLAB, Hp)),                        # w3
            _resident((Hp, SLAB)),                        # w4
            _resident((1, bias_w)),                       # packed biases
        ],
        out_specs=pl.BlockSpec((TB, SLAB), lambda i: (i, 0)),
        compiler_params=pltpu.CompilerParams(
            dimension_semantics=("parallel",),
            vmem_limit_bytes=32 * 1024 * 1024),
    )(xe, w1p, w2p, w3p, w4p, biasp)

    out = out[:B].astype(jnp.float32)
    recon = out[:, 0:C]
    z = out[:, z_off:z_off + L]
    mu = out[:, mu_off:mu_off + L]
    logvar = out[:, lv_off:lv_off + L]
    return z, recon, mu, logvar


# ----------------------------------------------------------------------------
# Deterministic parameter init (xavier_uniform for weights, zeros for biases),
# stored as (in_features, out_features) so the kernel does plain x @ W + b.
# ----------------------------------------------------------------------------
def xavier_uniform(key, fan_in, fan_out):
    bound = math.sqrt(6.0 / (fan_in + fan_out))
    return jax.random.uniform(
        key, (fan_in, fan_out), dtype=jnp.float32, minval=-bound, maxval=bound)


def init_params(key, input_channels, latent_dim):
    k1, k2, k3, k4 = jax.random.split(key, 4)
    C, L, H = input_channels, latent_dim, HIDDEN
    w1 = xavier_uniform(k1, C, H)
    b1 = jnp.zeros((H,), jnp.float32)
    w2 = xavier_uniform(k2, H, 2 * L)
    b2 = jnp.zeros((2 * L,), jnp.float32)
    w3 = xavier_uniform(k3, L, H)
    b3 = jnp.zeros((H,), jnp.float32)
    w4 = xavier_uniform(k4, H, C)
    b4 = jnp.zeros((C,), jnp.float32)
    return (w1, b1, w2, b2, w3, b3, w4, b4)


# ----------------------------------------------------------------------------
# Pure-JAX reference (same math, same default matmul precision) for the check.
# ----------------------------------------------------------------------------
def vae_reference(x, eps, params):
    (w1, b1, w2, b2, w3, b3, w4, b4) = params
    L = eps.shape[-1]
    h1 = jnp.maximum(x @ w1 + b1, 0.0)
    enc = h1 @ w2 + b2
    mu, logvar = enc[:, :L], enc[:, L:]
    z = mu + eps * jnp.exp(0.5 * logvar)
    h2 = jnp.maximum(z @ w3 + b3, 0.0)
    recon = h2 @ w4 + b4
    return z, recon, mu, logvar


if __name__ == "__main__":
    # Small shapes consistent with the module: x is (batch, input_channels).
    batch = 8
    input_channels = 32
    latent_dim = 16

    key = jax.random.PRNGKey(0)
    kx, keps, kp = jax.random.split(key, 3)

    x = jax.random.normal(kx, (batch, input_channels), dtype=jnp.float32)
    # eps ~ N(0,1) supplied as an explicit input (torch.randn_like equivalent)
    # so the reparameterization is reproducible / checkable.
    eps = jax.random.normal(keps, (batch, latent_dim), dtype=jnp.float32)

    params = init_params(kp, input_channels, latent_dim)
    packed = pack_params(params, input_channels, latent_dim)   # hoisted one-time packing

    z, recon, mu, logvar = jax.block_until_ready(vae_forward(x, eps, packed))

    # sanity check against plain-JAX reference (same default matmul precision)
    z_r, recon_r, mu_r, logvar_r = vae_reference(x, eps, params)
    assert jnp.allclose(z, z_r, atol=1e-5, rtol=1e-5)
    assert jnp.allclose(recon, recon_r, atol=1e-5, rtol=1e-5)
    assert jnp.allclose(mu, mu_r, atol=1e-5, rtol=1e-5)
    assert jnp.allclose(logvar, logvar_r, atol=1e-5, rtol=1e-5)

    print("KERNEL_OK")
</pallas_src>

<mosaic_0001>
module attributes {stable_mosaic.version = 11 : i64} {
  func.func @vae_kernel(%arg0: i32, %arg1: memref<8x128xf32, #tpu.memory_space<vmem>>, %arg2: memref<128x128xf32, #tpu.memory_space<vmem>>, %arg3: memref<128x128xf32, #tpu.memory_space<vmem>>, %arg4: memref<128x128xf32, #tpu.memory_space<vmem>>, %arg5: memref<128x128xf32, #tpu.memory_space<vmem>>, %arg6: memref<1x512xf32, #tpu.memory_space<vmem>>, %arg7: memref<8x128xf32, #tpu.memory_space<vmem>>) attributes {dimension_semantics = [#tpu.dimension_semantics<parallel>], iteration_bounds = array<i64: 1>, scalar_prefetch = 0 : i64, scratch_operands = 0 : i64, tpu.core_type = #tpu.core_type<tc>, window_params = [{transform_indices = @transform_0, window_bounds = array<i64: 8, 128>}, {pipeline_mode = #tpu.pipeline_mode<synchronous>, transform_indices = @transform_1, window_bounds = array<i64: 128, 128>}, {pipeline_mode = #tpu.pipeline_mode<synchronous>, transform_indices = @transform_2, window_bounds = array<i64: 128, 128>}, {pipeline_mode = #tpu.pipeline_mode<synchronous>, transform_indices = @transform_3, window_bounds = array<i64: 128, 128>}, {pipeline_mode = #tpu.pipeline_mode<synchronous>, transform_indices = @transform_4, window_bounds = array<i64: 128, 128>}, {pipeline_mode = #tpu.pipeline_mode<synchronous>, transform_indices = @transform_5, window_bounds = array<i64: 1, 512>}, {transform_indices = @transform_6, window_bounds = array<i64: 8, 128>}]} {
    %c0 = arith.constant 0 : index
    %c0_0 = arith.constant 0 : index
    %0 = vector.load %arg1[%c0, %c0_0] : memref<8x128xf32, #tpu.memory_space<vmem>>, vector<8x128xf32>
    %c0_1 = arith.constant 0 : index
    %c0_2 = arith.constant 0 : index
    %1 = vector.load %arg6[%c0_1, %c0_2] : memref<1x512xf32, #tpu.memory_space<vmem>>, vector<1x128xf32>
    %c0_3 = arith.constant 0 : index
    %c128 = arith.constant 128 : index
    %2 = vector.load %arg6[%c0_3, %c128] : memref<1x512xf32, #tpu.memory_space<vmem>>, vector<1x128xf32>
    %c0_4 = arith.constant 0 : index
    %c256 = arith.constant 256 : index
    %3 = vector.load %arg6[%c0_4, %c256] : memref<1x512xf32, #tpu.memory_space<vmem>>, vector<1x128xf32>
    %c0_5 = arith.constant 0 : index
    %c384 = arith.constant 384 : index
    %4 = vector.load %arg6[%c0_5, %c384] : memref<1x512xf32, #tpu.memory_space<vmem>>, vector<1x128xf32>
    %c0_6 = arith.constant 0 : index
    %c0_7 = arith.constant 0 : index
    %5 = vector.load %arg2[%c0_6, %c0_7] : memref<128x128xf32, #tpu.memory_space<vmem>>, vector<128x128xf32>
    %cst = arith.constant dense<0.000000e+00> : vector<8x128xf32>
    %6 = tpu.matmul %0, %5, %cst {dimension_numbers = #tpu.dot_dimension_numbers<[1], [0], [0], [1], [0, 0, 1, 1], [], []>} : vector<8x128xf32>, vector<128x128xf32>, vector<8x128xf32> -> vector<8x128xf32>
    %7 = vector.broadcast %1 : vector<1x128xf32> to vector<8x128xf32>
    %8 = arith.addf %6, %7 : vector<8x128xf32>
    %cst_8 = arith.constant 0.000000e+00 : f32
    %9 = vector.broadcast %cst_8 : f32 to vector<8x128xf32>
    %10 = arith.maximumf %8, %9 : vector<8x128xf32>
    %c0_9 = arith.constant 0 : index
    %c0_10 = arith.constant 0 : index
    %11 = vector.load %arg3[%c0_9, %c0_10] : memref<128x128xf32, #tpu.memory_space<vmem>>, vector<128x128xf32>
    %cst_11 = arith.constant dense<0.000000e+00> : vector<8x128xf32>
    %12 = tpu.matmul %10, %11, %cst_11 {dimension_numbers = #tpu.dot_dimension_numbers<[1], [0], [0], [1], [0, 0, 1, 1], [], []>} : vector<8x128xf32>, vector<128x128xf32>, vector<8x128xf32> -> vector<8x128xf32>
    %13 = vector.broadcast %2 : vector<1x128xf32> to vector<8x128xf32>
    %14 = arith.addf %12, %13 : vector<8x128xf32>
    %c112_i32 = arith.constant 112 : i32
    %15 = tpu.dynamic_rotate %14 by %c112_i32 dim 1 : vector<8x128xf32>, i32 -> vector<8x128xf32>
    %c96_i32 = arith.constant 96 : i32
    %16 = tpu.dynamic_rotate %14 by %c96_i32 dim 1 : vector<8x128xf32>, i32 -> vector<8x128xf32>
    %cst_12 = arith.constant 5.000000e-01 : f32
    %17 = vector.broadcast %cst_12 : f32 to vector<8x128xf32>
    %18 = arith.mulf %17, %16 : vector<8x128xf32>
    %19 = math.exp %18 : vector<8x128xf32>
    %20 = arith.mulf %0, %19 : vector<8x128xf32>
    %21 = arith.addf %15, %20 : vector<8x128xf32>
    %c0_13 = arith.constant 0 : index
    %c0_14 = arith.constant 0 : index
    %22 = vector.load %arg4[%c0_13, %c0_14] : memref<128x128xf32, #tpu.memory_space<vmem>>, vector<128x128xf32>
    %cst_15 = arith.constant dense<0.000000e+00> : vector<8x128xf32>
    %23 = tpu.matmul %21, %22, %cst_15 {dimension_numbers = #tpu.dot_dimension_numbers<[1], [0], [0], [1], [0, 0, 1, 1], [], []>} : vector<8x128xf32>, vector<128x128xf32>, vector<8x128xf32> -> vector<8x128xf32>
    %24 = vector.broadcast %3 : vector<1x128xf32> to vector<8x128xf32>
    %25 = arith.addf %23, %24 : vector<8x128xf32>
    %cst_16 = arith.constant 0.000000e+00 : f32
    %26 = vector.broadcast %cst_16 : f32 to vector<8x128xf32>
    %27 = arith.maximumf %25, %26 : vector<8x128xf32>
    %c0_17 = arith.constant 0 : index
    %c0_18 = arith.constant 0 : index
    %28 = vector.load %arg5[%c0_17, %c0_18] : memref<128x128xf32, #tpu.memory_space<vmem>>, vector<128x128xf32>
    %cst_19 = arith.constant dense<0.000000e+00> : vector<8x128xf32>
    %29 = tpu.matmul %27, %28, %cst_19 {dimension_numbers = #tpu.dot_dimension_numbers<[1], [0], [0], [1], [0, 0, 1, 1], [], []>} : vector<8x128xf32>, vector<128x128xf32>, vector<8x128xf32> -> vector<8x128xf32>
    %30 = vector.broadcast %4 : vector<1x128xf32> to vector<8x128xf32>
    %31 = arith.addf %29, %30 : vector<8x128xf32>
    %32 = tpu.iota {dimensions = array<i32: 1>} : vector<8x128xi32>
    %c32_i32 = arith.constant 32 : i32
    %33 = vector.broadcast %c32_i32 : i32 to vector<8x128xi32>
    %34 = arith.cmpi sge, %32, %33 : vector<8x128xi32>
    %c48_i32 = arith.constant 48 : i32
    %35 = vector.broadcast %c48_i32 : i32 to vector<8x128xi32>
    %36 = arith.cmpi slt, %32, %35 : vector<8x128xi32>
    %37 = arith.andi %34, %36 : vector<8x128xi1>
    %cst_20 = arith.constant 0.000000e+00 : f32
    %38 = vector.broadcast %cst_20 : f32 to vector<8x128xf32>
    %39 = arith.select %37, %21, %38 : vector<8x128xi1>, vector<8x128xf32>
    %40 = arith.addf %31, %14 : vector<8x128xf32>
    %41 = arith.addf %40, %39 : vector<8x128xf32>
    %c0_21 = arith.constant 0 : index
    %c0_22 = arith.constant 0 : index
    %42 = vector.load %arg7[%c0_21, %c0_22] : memref<8x128xf32, #tpu.memory_space<vmem>>, vector<8x128xf32>
    tpu.vector_store %arg7[%c0_21, %c0_22], %41 {strides = array<i32>} : memref<8x128xf32, #tpu.memory_space<vmem>>, vector<8x128xf32>,
    return
  }
  func.func @transform_0(%arg0: i32) -> (i32, i32) {
    %c0_i32 = arith.constant 0 : i32
    %c0_i32_0 = arith.constant 0 : i32
    return %arg0, %c0_i32 : i32, i32
  }
  func.func @transform_1(%arg0: i32) -> (i32, i32) {
    %c0_i32 = arith.constant 0 : i32
    %c0_i32_0 = arith.constant 0 : i32
    %c0_i32_1 = arith.constant 0 : i32
    return %c0_i32, %c0_i32_0 : i32, i32
  }
  func.func @transform_2(%arg0: i32) -> (i32, i32) {
    %c0_i32 = arith.constant 0 : i32
    %c0_i32_0 = arith.constant 0 : i32
    %c0_i32_1 = arith.constant 0 : i32
    return %c0_i32, %c0_i32_0 : i32, i32
  }
  func.func @transform_3(%arg0: i32) -> (i32, i32) {
    %c0_i32 = arith.constant 0 : i32
    %c0_i32_0 = arith.constant 0 : i32
    %c0_i32_1 = arith.constant 0 : i32
    return %c0_i32, %c0_i32_0 : i32, i32
  }
  func.func @transform_4(%arg0: i32) -> (i32, i32) {
    %c0_i32 = arith.constant 0 : i32
    %c0_i32_0 = arith.constant 0 : i32
    %c0_i32_1 = arith.constant 0 : i32
    return %c0_i32, %c0_i32_0 : i32, i32
  }
  func.func @transform_5(%arg0: i32) -> (i32, i32) {
    %c0_i32 = arith.constant 0 : i32
    %c0_i32_0 = arith.constant 0 : i32
    %c0_i32_1 = arith.constant 0 : i32
    return %c0_i32, %c0_i32_0 : i32, i32
  }
  func.func @transform_6(%arg0: i32) -> (i32, i32) {
    %c0_i32 = arith.constant 0 : i32
    %c0_i32_0 = arith.constant 0 : i32
    return %arg0, %c0_i32 : i32, i32
  }
}

</mosaic_0001>

<llo_original>
// kernel: tpu_custom_call.1
$region0: #{tpu_custom_call.1}
  #allocation0 [shape = 'u32[]', space=smem, size = 0x4, offset = 0x4, fixed_abs, tag = 'smem constant byte address 0x4 - core index']
  #allocation1 [shape = 'u32[72,128]{1,0:T(1,128)}', space=vmem, size = 0x9000, scoped, tag = 'internal scratch']
  %s0 = inlined_call_operand.hbm [shape: f32[8,128], index: 0, kind: input, shape index: {}]
  %s1 = inlined_call_operand.hbm [shape: f32[128,128], index: 1, kind: input, shape index: {}]
  %s2 = inlined_call_operand.hbm [shape: f32[128,128], index: 2, kind: input, shape index: {}]
  %s3 = inlined_call_operand.hbm [shape: f32[128,128], index: 3, kind: input, shape index: {}]
  %s4 = inlined_call_operand.hbm [shape: f32[128,128], index: 4, kind: input, shape index: {}]
  %s5 = inlined_call_operand.vmem [shape: f32[1,512], index: 5, kind: input, shape index: {}]
  %s6 = inlined_call_operand.hbm [shape: f32[8,128], index: 6, kind: output, shape index: {}]
  %s7 = sld [smem:[#allocation0]]
  $region54: #{tpu_custom_call.1} parent=0
    _
  %s9 = ssub.s32 1, %s7
  %s10 = scalar_select 0, %s9, %s7
  $region1: #{tpu_custom_call.1} parent=0
    #allocation2 [shape = 'u8[4096]{0}', space=vmem, size = 0x1000, scoped, tag = 'input window, operand 0, single buffered']
    #allocation3 [shape = 's32[1]{0}', space=sflag, size = 0x4, scoped, tag = 'scoped memory for tpu_custom_call.1']
    #allocation4 [shape = 's32[1]{0}', space=sflag, size = 0x4, scoped, tag = 'scoped memory for tpu_custom_call.1']
    #allocation5 [shape = 'u8[65536]{0}', space=vmem, size = 0x10000, scoped, tag = 'input window, operand 1, single buffered']
    #allocation6 [shape = 's32[1]{0}', space=sflag, size = 0x4, scoped, tag = 'scoped memory for tpu_custom_call.1']
    #allocation7 [shape = 'u8[65536]{0}', space=vmem, size = 0x10000, scoped, tag = 'input window, operand 2, single buffered']
    #allocation8 [shape = 'u8[65536]{0}', space=vmem, size = 0x10000, scoped, tag = 'input window, operand 3, single buffered']
    #allocation9 [shape = 's32[1]{0}', space=sflag, size = 0x4, scoped, tag = 'scoped memory for tpu_custom_call.1']
    #allocation10 [shape = 'u8[65536]{0}', space=vmem, size = 0x10000, scoped, tag = 'input window, operand 4, single buffered']
    #allocation11 [shape = 'u8[4096]{0}', space=vmem, size = 0x1000, scoped, tag = 'output window, operand 0, single buffered']
    %11 = vsyncpa [#allocation3], 0
    %12 = vsyncpa [#allocation6], 0
    %13 = vsyncpa [#allocation9], 0
    %14 = vsyncpa [#allocation4], 0
    // Predicated region
    $region2: #{tpu_custom_call.1} parent=1 // pred_check
      _
    $region3: #{tpu_custom_call.1} parent=1 // pred_check_branch
      %16 = sbr.rel (0) target = $region5
    $region4: #{tpu_custom_call.1} parent=1 // pred_region
      %18 = vsyncadd [#allocation3], 0
      %s20 = sshll.u32 %s0, 4
      %s21 = int_to_ptr.hbm [resolvable:$true] %s20
      %s22 = sshll.u32 [#allocation2], 4
      %s23 = int_to_ptr.vmem [resolvable:$true] %s22
      %25 = dma.hbm_to_vmem [thread:$0]  %s21, 128, %s23, [#allocation3]
    $region5: #{tpu_custom_call.1} parent=1 // pred_fallthru
      _
    // Predicated region
    $region6: #{tpu_custom_call.1} parent=1 // pred_check
      _
    $region7: #{tpu_custom_call.1} parent=1 // pred_check_branch
      %27 = sbr.rel (0) target = $region9
    $region8: #{tpu_custom_call.1} parent=1 // pred_region
      %29 = vsyncadd [#allocation6], 0
      %s30 = sshll.u32 %s1, 4
      %s31 = int_to_ptr.hbm [resolvable:$true] %s30
      %s32 = sshll.u32 [#allocation5], 4
      %s33 = int_to_ptr.vmem [resolvable:$true] %s32
      %38 = dma.hbm_to_vmem [thread:$0]  %s31, 2048, %s33, [#allocation6], 128, 128, 8
    $region9: #{tpu_custom_call.1} parent=1 // pred_fallthru
      _
    // Predicated region
    $region10: #{tpu_custom_call.1} parent=1 // pred_check
      _
    $region11: #{tpu_custom_call.1} parent=1 // pred_check_branch
      %40 = sbr.rel (0) target = $region13
    $region12: #{tpu_custom_call.1} parent=1 // pred_region
      %42 = vsyncadd [#allocation6], 0
      %s43 = sshll.u32 %s2, 4
      %s44 = int_to_ptr.hbm [resolvable:$true] %s43
      %s45 = sshll.u32 [#allocation7], 4
      %s46 = int_to_ptr.vmem [resolvable:$true] %s45
      %51 = dma.hbm_to_vmem [thread:$0]  %s44, 2048, %s46, [#allocation6], 128, 128, 8
    $region13: #{tpu_custom_call.1} parent=1 // pred_fallthru
      _
    // Predicated region
    $region14: #{tpu_custom_call.1} parent=1 // pred_check
      _
    $region15: #{tpu_custom_call.1} parent=1 // pred_check_branch
      %53 = sbr.rel (0) target = $region17
    $region16: #{tpu_custom_call.1} parent=1 // pred_region
      %55 = vsyncadd [#allocation9], 0
      %s56 = sshll.u32 %s3, 4
      %s57 = int_to_ptr.hbm [resolvable:$true] %s56
      %s58 = sshll.u32 [#allocation8], 4
      %s59 = int_to_ptr.vmem [resolvable:$true] %s58
      %64 = dma.hbm_to_vmem [thread:$0]  %s57, 2048, %s59, [#allocation9], 128, 128, 8
    $region17: #{tpu_custom_call.1} parent=1 // pred_fallthru
      _
    // Predicated region
    $region18: #{tpu_custom_call.1} parent=1 // pred_check
      _
    $region19: #{tpu_custom_call.1} parent=1 // pred_check_branch
      %66 = sbr.rel (0) target = $region21
    $region20: #{tpu_custom_call.1} parent=1 // pred_region
      %68 = vsyncadd [#allocation9], 0
      %s69 = sshll.u32 %s4, 4
      %s70 = int_to_ptr.hbm [resolvable:$true] %s69
      %s71 = sshll.u32 [#allocation10], 4
      %s72 = int_to_ptr.vmem [resolvable:$true] %s71
      %77 = dma.hbm_to_vmem [thread:$0]  %s70, 2048, %s72, [#allocation9], 128, 128, 8
    $region21: #{tpu_custom_call.1} parent=1 // pred_fallthru
      _
    // Predicated region
    $region22: #{tpu_custom_call.1} parent=1 // pred_check
      _
    $region23: #{tpu_custom_call.1} parent=1 // pred_check_branch
      %79 = sbr.rel (0) target = $region25
    $region24: #{tpu_custom_call.1} parent=1 // pred_region
      _
    $region25: #{tpu_custom_call.1} parent=1 // pred_fallthru
      _
    // Predicated region
    $region26: #{tpu_custom_call.1} parent=1 // pred_check
      _
    $region27: #{tpu_custom_call.1} parent=1 // pred_check_branch
      %81 = sbr.rel (0) target = $region29
    $region28: #{tpu_custom_call.1} parent=1 // pred_region
      %83 = dma.done [#allocation3], 128
    $region29: #{tpu_custom_call.1} parent=1 // pred_fallthru
      _
    // Predicated region
    $region30: #{tpu_custom_call.1} parent=1 // pred_check
      _
    $region31: #{tpu_custom_call.1} parent=1 // pred_check_branch
      %85 = sbr.rel (0) target = $region33
    $region32: #{tpu_custom_call.1} parent=1 // pred_region
      %87 = dma.done [#allocation6], 2048
    $region33: #{tpu_custom_call.1} parent=1 // pred_fallthru
      _
    // Predicated region
    $region34: #{tpu_custom_call.1} parent=1 // pred_check
      _
    $region35: #{tpu_custom_call.1} parent=1 // pred_check_branch
      %89 = sbr.rel (0) target = $region37
    $region36: #{tpu_custom_call.1} parent=1 // pred_region
      %91 = dma.done [#allocation6], 2048
    $region37: #{tpu_custom_call.1} parent=1 // pred_fallthru
      _
    // Predicated region
    $region38: #{tpu_custom_call.1} parent=1 // pred_check
      _
    $region39: #{tpu_custom_call.1} parent=1 // pred_check_branch
      %93 = sbr.rel (0) target = $region41
    $region40: #{tpu_custom_call.1} parent=1 // pred_region
      %95 = dma.done [#allocation9], 2048
    $region41: #{tpu_custom_call.1} parent=1 // pred_fallthru
      _
    // Predicated region
    $region42: #{tpu_custom_call.1} parent=1 // pred_check
      _
    $region43: #{tpu_custom_call.1} parent=1 // pred_check_branch
      %97 = sbr.rel (0) target = $region45
    $region44: #{tpu_custom_call.1} parent=1 // pred_region
      %99 = dma.done [#allocation9], 2048
    $region45: #{tpu_custom_call.1} parent=1 // pred_fallthru
      _
    %v100 = vld [vmem:[#allocation2] sm:$0xff]
    %v101 = vld [vmem:[%s5] sm:$0x1]
    %v102 = vld [vmem:[%s5 + $0x1] sm:$0x1]
    %v103 = vld [vmem:[%s5 + $0x2] sm:$0x1]
    %v104 = vld [vmem:[%s5 + $0x3] sm:$0x1]
    %v105 = vld [vmem:[#allocation5] sm:$0xff]
    %v106 = vld [vmem:[#allocation5 + $0x8] sm:$0xff]
    %v107 = vld [vmem:[#allocation5 + $0x10] sm:$0xff]
    %v108 = vld [vmem:[#allocation5 + $0x18] sm:$0xff]
    %v109 = vld [vmem:[#allocation5 + $0x20] sm:$0xff]
    %v110 = vld [vmem:[#allocation5 + $0x28] sm:$0xff]
    %v111 = vld [vmem:[#allocation5 + $0x30] sm:$0xff]
    %v112 = vld [vmem:[#allocation5 + $0x38] sm:$0xff]
    %v113 = vld [vmem:[#allocation5 + $0x40] sm:$0xff]
    %v114 = vld [vmem:[#allocation5 + $0x48] sm:$0xff]
    %v115 = vld [vmem:[#allocation5 + $0x50] sm:$0xff]
    %v116 = vld [vmem:[#allocation5 + $0x58] sm:$0xff]
    %v117 = vld [vmem:[#allocation5 + $0x60] sm:$0xff]
    %v118 = vld [vmem:[#allocation5 + $0x68] sm:$0xff]
    %v119 = vld [vmem:[#allocation5 + $0x70] sm:$0xff]
    %v120 = vld [vmem:[#allocation5 + $0x78] sm:$0xff]
    %v122 = vperm.slane %v101, 0
    %124 = vmatpush.msra.mxu0 %v120
    %125 = vmatpush.msra.mxu0 %v119
    %126 = vmatpush.msra.mxu0 %v118
    %127 = vmatpush.msra.mxu0 %v117
    %128 = vmatpush.msra.mxu0 %v116
    %129 = vmatpush.msra.mxu0 %v115
    %130 = vmatpush.msra.mxu0 %v114
    %131 = vmatpush.msra.mxu0 %v113
    %132 = vmatpush.msra.mxu0 %v112
    %133 = vmatpush.msra.mxu0 %v111
    %134 = vmatpush.msra.mxu0 %v110
    %135 = vmatpush.msra.mxu0 %v109
    %136 = vmatpush.msra.mxu0 %v108
    %137 = vmatpush.msra.mxu0 %v107
    %138 = vmatpush.msra.mxu0 %v106
    %139 = vmatpush.msra.mxu0 %v105
    %140 = vmatmul.f32.gmra.mxu0 %v100
    %v141 = vpop.f32.mrf.mxu0
    %v142 = vadd.f32 %v122, %v141
    %143 = vdwg.mxu0
    %v144 = vmax.f32 %v142, 0.0
    %v145 = vld [vmem:[#allocation7] sm:$0xff]
    %v146 = vld [vmem:[#allocation7 + $0x8] sm:$0xff]
    %v147 = vld [vmem:[#allocation7 + $0x10] sm:$0xff]
    %v148 = vld [vmem:[#allocation7 + $0x18] sm:$0xff]
    %v149 = vld [vmem:[#allocation7 + $0x20] sm:$0xff]
    %v150 = vld [vmem:[#allocation7 + $0x28] sm:$0xff]
    %v151 = vld [vmem:[#allocation7 + $0x30] sm:$0xff]
    %v152 = vld [vmem:[#allocation7 + $0x38] sm:$0xff]
    %v153 = vld [vmem:[#allocation7 + $0x40] sm:$0xff]
    %v154 = vld [vmem:[#allocation7 + $0x48] sm:$0xff]
    %v155 = vld [vmem:[#allocation7 + $0x50] sm:$0xff]
    %v156 = vld [vmem:[#allocation7 + $0x58] sm:$0xff]
    %v157 = vld [vmem:[#allocation7 + $0x60] sm:$0xff]
    %v158 = vld [vmem:[#allocation7 + $0x68] sm:$0xff]
    %v159 = vld [vmem:[#allocation7 + $0x70] sm:$0xff]
    %v160 = vld [vmem:[#allocation7 + $0x78] sm:$0xff]
    %v162 = vperm.slane %v102, 0
    %164 = vmatpush.msra.mxu0 %v160
    %165 = vmatpush.msra.mxu0 %v159
    %166 = vmatpush.msra.mxu0 %v158
    %167 = vmatpush.msra.mxu0 %v157
    %168 = vmatpush.msra.mxu0 %v156
    %169 = vmatpush.msra.mxu0 %v155
    %170 = vmatpush.msra.mxu0 %v154
    %171 = vmatpush.msra.mxu0 %v153
    %172 = vmatpush.msra.mxu0 %v152
    %173 = vmatpush.msra.mxu0 %v151
    %174 = vmatpush.msra.mxu0 %v150
    %175 = vmatpush.msra.mxu0 %v149
    %176 = vmatpush.msra.mxu0 %v148
    %177 = vmatpush.msra.mxu0 %v147
    %178 = vmatpush.msra.mxu0 %v146
    %179 = vmatpush.msra.mxu0 %v145
    %180 = vmatmul.f32.gmra.mxu0 %v144
    %v181 = vpop.f32.mrf.mxu0
    %v182 = vadd.f32 %v162, %v181
    %183 = vdwg.mxu0
    %184 = vrot.lane.b32.xlu0 %v182, 112
    %v185 = vpop.permute.xlu0 %184
    %186 = vrot.lane.b32.xlu0 %v182, 96
    %v187 = vpop.permute.xlu0 %186
    %v188 = vmul.f32 %v187, 0.5
    %v189 = vmul.f32 %v188, 1.442695
    %v190 = vpow.pop %v189
    %v191 = vmul.f32 %v100, %v190
    %v192 = vadd.f32 %v185, %v191
    %v193 = vld [vmem:[#allocation8] sm:$0xff]
    %v194 = vld [vmem:[#allocation8 + $0x8] sm:$0xff]
    %v195 = vld [vmem:[#allocation8 + $0x10] sm:$0xff]
    %v196 = vld [vmem:[#allocation8 + $0x18] sm:$0xff]
    %v197 = vld [vmem:[#allocation8 + $0x20] sm:$0xff]
    %v198 = vld [vmem:[#allocation8 + $0x28] sm:$0xff]
    %v199 = vld [vmem:[#allocation8 + $0x30] sm:$0xff]
    %v200 = vld [vmem:[#allocation8 + $0x38] sm:$0xff]
    %v201 = vld [vmem:[#allocation8 + $0x40] sm:$0xff]
    %v202 = vld [vmem:[#allocation8 + $0x48] sm:$0xff]
    %v203 = vld [vmem:[#allocation8 + $0x50] sm:$0xff]
    %v204 = vld [vmem:[#allocation8 + $0x58] sm:$0xff]
    %v205 = vld [vmem:[#allocation8 + $0x60] sm:$0xff]
    %v206 = vld [vmem:[#allocation8 + $0x68] sm:$0xff]
    %v207 = vld [vmem:[#allocation8 + $0x70] sm:$0xff]
    %v208 = vld [vmem:[#allocation8 + $0x78] sm:$0xff]
    %v210 = vperm.slane %v103, 0
    %212 = vmatpush.msra.mxu0 %v208
    %213 = vmatpush.msra.mxu0 %v207
    %214 = vmatpush.msra.mxu0 %v206
    %215 = vmatpush.msra.mxu0 %v205
    %216 = vmatpush.msra.mxu0 %v204
    %217 = vmatpush.msra.mxu0 %v203
    %218 = vmatpush.msra.mxu0 %v202
    %219 = vmatpush.msra.mxu0 %v201
    %220 = vmatpush.msra.mxu0 %v200
    %221 = vmatpush.msra.mxu0 %v199
    %222 = vmatpush.msra.mxu0 %v198
    %223 = vmatpush.msra.mxu0 %v197
    %224 = vmatpush.msra.mxu0 %v196
    %225 = vmatpush.msra.mxu0 %v195
    %226 = vmatpush.msra.mxu0 %v194
    %227 = vmatpush.msra.mxu0 %v193
    %228 = vmatmul.f32.gmra.mxu0 %v192
    %v229 = vpop.f32.mrf.mxu0
    %v230 = vadd.f32 %v210, %v229
    %231 = vdwg.mxu0
    %v232 = vmax.f32 %v230, 0.0
    %v233 = vld [vmem:[#allocation10] sm:$0xff]
    %v234 = vld [vmem:[#allocation10 + $0x8] sm:$0xff]
    %v235 = vld [vmem:[#allocation10 + $0x10] sm:$0xff]
    %v236 = vld [vmem:[#allocation10 + $0x18] sm:$0xff]
    %v237 = vld [vmem:[#allocation10 + $0x20] sm:$0xff]
    %v238 = vld [vmem:[#allocation10 + $0x28] sm:$0xff]
    %v239 = vld [vmem:[#allocation10 + $0x30] sm:$0xff]
    %v240 = vld [vmem:[#allocation10 + $0x38] sm:$0xff]
    %v241 = vld [vmem:[#allocation10 + $0x40] sm:$0xff]
    %v242 = vld [vmem:[#allocation10 + $0x48] sm:$0xff]
    %v243 = vld [vmem:[#allocation10 + $0x50] sm:$0xff]
    %v244 = vld [vmem:[#allocation10 + $0x58] sm:$0xff]
    %v245 = vld [vmem:[#allocation10 + $0x60] sm:$0xff]
    %v246 = vld [vmem:[#allocation10 + $0x68] sm:$0xff]
    %v247 = vld [vmem:[#allocation10 + $0x70] sm:$0xff]
    %v248 = vld [vmem:[#allocation10 + $0x78] sm:$0xff]
    %v250 = vperm.slane %v104, 0
    %252 = vmatpush.msra.mxu0 %v248
    %253 = vmatpush.msra.mxu0 %v247
    %254 = vmatpush.msra.mxu0 %v246
    %255 = vmatpush.msra.mxu0 %v245
    %256 = vmatpush.msra.mxu0 %v244
    %257 = vmatpush.msra.mxu0 %v243
    %258 = vmatpush.msra.mxu0 %v242
    %259 = vmatpush.msra.mxu0 %v241
    %260 = vmatpush.msra.mxu0 %v240
    %261 = vmatpush.msra.mxu0 %v239
    %262 = vmatpush.msra.mxu0 %v238
    %263 = vmatpush.msra.mxu0 %v237
    %264 = vmatpush.msra.mxu0 %v236
    %265 = vmatpush.msra.mxu0 %v235
    %266 = vmatpush.msra.mxu0 %v234
    %267 = vmatpush.msra.mxu0 %v233
    %268 = vmatmul.f32.gmra.mxu0 %v232
    %v269 = vpop.f32.mrf.mxu0
    %v270 = vadd.f32 %v250, %v269
    %271 = vdwg.mxu0
    %v272 = vlaneseq
    %v273 = vand.u32 %v272, 127
    %vm274 = vcmp.ge.s32.totalorder %v273, 32
    %vm275 = vcmp.lt.s32.totalorder %v273, 48
    %vm276 = vmand %vm274, %vm275
    %v277 = vsel %vm276, %v192, 0.0
    %v278 = vadd.f32 %v270, %v182
    %v279 = vadd.f32 %v278, %v277
    %280 = vst [vmem:[#allocation11] sm:$0xff] %v279
    // Predicated region
    $region46: #{tpu_custom_call.1} parent=1 // pred_check
      _
    $region47: #{tpu_custom_call.1} parent=1 // pred_check_branch
      %282 = sbr.rel (0) target = $region49
    $region48: #{tpu_custom_call.1} parent=1 // pred_region
      %284 = vsyncadd [#allocation4], 0
      %s286 = sshll.u32 [#allocation11], 4
      %s287 = int_to_ptr.vmem [resolvable:$true] %s286
      %s288 = sshll.u32 %s6, 4
      %s289 = int_to_ptr.hbm [resolvable:$true] %s288
      %291 = dma.vmem_to_hbm [thread:$0]  %s287, 128, %s289, [#allocation4]
    $region49: #{tpu_custom_call.1} parent=1 // pred_fallthru
      _
    // Predicated region
    $region50: #{tpu_custom_call.1} parent=1 // pred_check
      _
    $region51: #{tpu_custom_call.1} parent=1 // pred_check_branch
      %293 = sbr.rel (0) target = $region53
    $region52: #{tpu_custom_call.1} parent=1 // pred_region
      %295 = dma.done [#allocation4], 128
    $region53: #{tpu_custom_call.1} parent=1 // pred_fallthru
      _
    %296 = vsyncpa [#allocation3], 1
    %297 = vsyncpa [#allocation6], 1
    %298 = vsyncpa [#allocation9], 1
    %299 = vsyncpa [#allocation4], 1

</llo_original>
